<compile_context>
chip_gen: v7x
topology: tpu7x:2x2x1
jax: 0.10.0
libtpu: 0.0.40
codegen_flags: <defaults>
</compile_context>

<pallas_src>
import math

import jax
import jax.numpy as jnp
from jax import lax
from jax.experimental import pallas as pl
from jax.experimental.pallas import tpu as pltpu


def _round_up(x: int, m: int) -> int:
    return ((x + m - 1) // m) * m


def _make_embed_sum_kernel(C: int, GFC: int, num_planes: int, rep_precision):
    def kernel(idx_ref, rep_ref, w_ref, out_ref):
        # idx_ref: (tm_s, G*F)  int32   -- G original rows packed per super row
        # rep_ref: (G*F, G*F*C) f32     -- 0/1 lane-replication matrix (resident)
        # w_ref:   (P, G*F*C, G*D) bf16 -- stacked block-diag codebook planes
        # out_ref: (tm_s, G*D)  f32     -- lane-dense (G*D multiple of 128)
        idx_f = idx_ref[...].astype(jnp.float32)

        # expanded[s, j] = idx[s, j // C]  (constant-permutation lane repeat, MXU)
        expanded = jnp.dot(idx_f, rep_ref[...],
                           preferred_element_type=jnp.float32,
                           precision=rep_precision)

        # pattern[j] = j % C  -> single compare + cast builds the full one-hot.
        lane = lax.broadcasted_iota(jnp.int32, (1, GFC), 1)
        pattern = (lane % C).astype(jnp.float32)
        onehot = (expanded == pattern).astype(jnp.bfloat16)

        # gather + sum over F == onehot @ W_stack.  W is split into bf16 planes
        # (the 0/1 LHS is exact in bf16) -> num_planes single-pass MXU dots.
        acc = jnp.dot(onehot, w_ref[0], preferred_element_type=jnp.float32)
        for p in range(1, num_planes):
            acc = acc + jnp.dot(onehot, w_ref[p],
                                preferred_element_type=jnp.float32)
        out_ref[...] = acc

    return kernel


def embed_pcqm4mv2_node_features(node_features, codebook_weight, *,
                                 tm_super: int = 4096,
                                 num_w_planes: int = 3,
                                 vmem_budget_bytes: int = 24 << 20):
    """node_features: [B, N, F] int; codebook_weight: [C, D] f32 -> [B, N, D] f32."""
    B, N, F = node_features.shape
    C, D = codebook_weight.shape
    M = B * N

    # Pack G rows per super row so the output tile is G*D lanes (multiple of 128
    # when D | 128) -> unmasked stores, MXU N dimension = 128.
    G = 128 // math.gcd(D, 128)
    if G > 16:                      # pathological D; fall back to ungrouped layout
        G = 1
    GD, GF, GFC = G * D, G * F, G * F * C

    idx = node_features.reshape(M, F).astype(jnp.int32)

    # ---- tiling: cap tile by a VMEM budget, keep tile count even and >= 2 ----
    M_s = -(-M // G)                                   # super rows (cdiv)
    gfc_pad = _round_up(GFC, 128)
    per_row_bytes = (2 * 128 * 4     # idx tile (lane-padded, double-buffered)
                     + 2 * GD * 4    # out tile (double-buffered)
                     + gfc_pad * 4   # expanded f32 temp
                     + gfc_pad * 2   # one-hot bf16 temp
                     + GD * 4)       # f32 accumulator temp
    tm_cap = max(8, (vmem_budget_bytes // per_row_bytes) // 8 * 8)
    tm = min(tm_super, tm_cap)

    num_tiles = max(1, -(-M_s // tm))
    if M_s >= 16:
        num_tiles = max(num_tiles, 2)          # keep both v7x TensorCores fed
    if num_tiles > 1 and num_tiles % 2:
        num_tiles += 1                         # even split -> balanced megacore
    tm_s = _round_up(-(-M_s // num_tiles), 8)  # sublane-aligned full tiles
    M_s_pad = num_tiles * tm_s
    M_pad = M_s_pad * G

    if M_pad != M:
        idx = jnp.pad(idx, ((0, M_pad - M), (0, 0)))   # pad rows: index 0, sliced off
    idx_super = idx.reshape(M_s_pad, GF)               # row-major packing

    # Lane-replication matrix: expanded = idx_super @ rep,  rep[j, j*C + c] = 1.
    rep = jnp.kron(jnp.eye(GF, dtype=jnp.float32),
                   jnp.ones((1, C), jnp.float32))       # (GF, GFC)

    # Stacked block-diagonal codebook, split into bf16 hi/mid/lo planes.
    w = codebook_weight.astype(jnp.float32)
    w_stack = jnp.kron(jnp.eye(G, dtype=jnp.float32),
                       jnp.tile(w, (F, 1)))             # (GFC, GD)
    planes, resid = [], w_stack
    for _ in range(num_w_planes):
        p = resid.astype(jnp.bfloat16)
        planes.append(p)
        resid = resid - p.astype(jnp.float32)
    w_planes = jnp.stack(planes, axis=0)                # (P, GFC, GD) bf16

    # Index values <= 255 are exact in bf16 -> single-pass replication matmul;
    # otherwise fall back to HIGHEST (still tiny: K = GF).
    rep_precision = (lax.Precision.DEFAULT if C <= 256
                     else lax.Precision.HIGHEST)

    kernel = _make_embed_sum_kernel(C, GFC, num_w_planes, rep_precision)
    out_super = pl.pallas_call(
        kernel,
        out_shape=jax.ShapeDtypeStruct((M_s_pad, GD), jnp.float32),
        grid_spec=pltpu.PrefetchScalarGridSpec(
            num_scalar_prefetch=0,
            grid=(num_tiles,),
            in_specs=[
                pl.BlockSpec((tm_s, GF), lambda i: (i, 0)),          # index tile
                pl.BlockSpec((GF, GFC), lambda i: (0, 0)),           # rep: resident
                pl.BlockSpec((num_w_planes, GFC, GD),
                             lambda i: (0, 0, 0)),                   # W planes: resident
            ],
            out_specs=pl.BlockSpec((tm_s, GD), lambda i: (i, 0)),
        ),
        compiler_params=pltpu.CompilerParams(
            dimension_semantics=("parallel",),
            vmem_limit_bytes=48 * 1024 * 1024),
    )(idx_super, rep, w_planes)

    out = out_super.reshape(M_pad, D)[:M]
    return out.reshape(B, N, D)


if __name__ == "__main__":
    # Synthetic, deterministic setup (no checkpoint load).
    # PCQM4Mv2 meta: codebook_length = task_node_feat + 1 (stand-in value below).
    model_dim = 32          # D
    codebook_length = 10    # C
    B, N, F = 2, 8, 4       # graphs, nodes per graph, node-feature slots

    key = jax.random.PRNGKey(0)
    k_w, k_idx = jax.random.split(key)

    codebook_weight = jax.random.normal(k_w, (codebook_length, model_dim),
                                        dtype=jnp.float32)
    node_features = jax.random.randint(k_idx, (B, N, F), 0, codebook_length,
                                       dtype=jnp.int32)

    out = embed_pcqm4mv2_node_features(node_features, codebook_weight)
    out = jax.block_until_ready(out)

    # Reference: codebook.weight[node_features].sum(dim=-2)
    ref = jnp.take(codebook_weight, node_features, axis=0).sum(axis=-2)
    assert out.shape == (B, N, model_dim)
    assert jnp.allclose(out, ref, atol=1e-5, rtol=1e-5)

    print("KERNEL_OK")
</pallas_src>

<mosaic_0001>
module attributes {stable_mosaic.version = 11 : i64} {
  func.func @kernel(%arg0: i32, %arg1: memref<8x16xi32, #tpu.memory_space<vmem>>, %arg2: memref<16x160xf32, #tpu.memory_space<vmem>>, %arg3: memref<3x160x128xbf16, #tpu.memory_space<vmem>>, %arg4: memref<8x128xf32, #tpu.memory_space<vmem>>) attributes {dimension_semantics = [#tpu.dimension_semantics<parallel>], iteration_bounds = array<i64: 1>, scalar_prefetch = 0 : i64, scratch_operands = 0 : i64, tpu.core_type = #tpu.core_type<tc>, window_params = [{transform_indices = @transform_0, window_bounds = array<i64: 8, 16>}, {pipeline_mode = #tpu.pipeline_mode<synchronous>, transform_indices = @transform_1, window_bounds = array<i64: 16, 160>}, {pipeline_mode = #tpu.pipeline_mode<synchronous>, transform_indices = @transform_2, window_bounds = array<i64: 3, 160, 128>}, {transform_indices = @transform_3, window_bounds = array<i64: 8, 128>}]} {
    %c0 = arith.constant 0 : index
    %c0_0 = arith.constant 0 : index
    %0 = vector.load %arg1[%c0, %c0_0] : memref<8x16xi32, #tpu.memory_space<vmem>>, vector<8x16xi32>
    %1 = arith.sitofp %0 : vector<8x16xi32> to vector<8x16xf32>
    %c0_1 = arith.constant 0 : index
    %c0_2 = arith.constant 0 : index
    %2 = vector.load %arg2[%c0_1, %c0_2] : memref<16x160xf32, #tpu.memory_space<vmem>>, vector<16x160xf32>
    %cst = arith.constant dense<0.000000e+00> : vector<8x160xf32>
    %3 = tpu.matmul %1, %2, %cst {dimension_numbers = #tpu.dot_dimension_numbers<[1], [0], [0], [1], [0, 0, 1, 1], [], []>} : vector<8x16xf32>, vector<16x160xf32>, vector<8x160xf32> -> vector<8x160xf32>
    %4 = tpu.iota {dimensions = array<i32: 1>} : vector<1x160xi32>
    %c10_i32 = arith.constant 10 : i32
    %c0_i32 = arith.constant 0 : i32
    %5 = arith.cmpi eq, %c10_i32, %c0_i32 : i32
    %c1_i32 = arith.constant 1 : i32
    %6 = arith.select %5, %c1_i32, %c10_i32 : i32
    %7 = vector.broadcast %6 : i32 to vector<1x160xi32>
    %8 = arith.remsi %4, %7 : vector<1x160xi32>
    %c0_i32_3 = arith.constant 0 : i32
    %9 = vector.broadcast %c0_i32_3 : i32 to vector<1x160xi32>
    %10 = arith.cmpi ne, %8, %9 : vector<1x160xi32>
    %c0_i32_4 = arith.constant 0 : i32
    %11 = vector.broadcast %c0_i32_4 : i32 to vector<1x160xi32>
    %12 = arith.cmpi slt, %8, %11 : vector<1x160xi32>
    %c0_i32_5 = arith.constant 0 : i32
    %13 = arith.cmpi slt, %6, %c0_i32_5 : i32
    %14 = vector.broadcast %13 : i1 to vector<1x160xi1>
    %15 = vector.broadcast %14 : vector<1x160xi1> to vector<1x160xi1>
    %16 = arith.xori %12, %15 : vector<1x160xi1>
    %17 = arith.andi %16, %10 : vector<1x160xi1>
    %18 = vector.broadcast %6 : i32 to vector<1x160xi32>
    %19 = arith.addi %8, %18 : vector<1x160xi32>
    %20 = arith.select %17, %19, %8 : vector<1x160xi1>, vector<1x160xi32>
    %21 = arith.sitofp %20 : vector<1x160xi32> to vector<1x160xf32>
    %22 = vector.broadcast %21 : vector<1x160xf32> to vector<8x160xf32>
    %23 = arith.cmpf oeq, %3, %22 : vector<8x160xf32>
    %24 = arith.extui %23 : vector<8x160xi1> to vector<8x160xi32>
    %25 = arith.sitofp %24 : vector<8x160xi32> to vector<8x160xf32>
    %26 = arith.truncf %25 : vector<8x160xf32> to vector<8x160xbf16>
    %c0_6 = arith.constant 0 : index
    %c0_7 = arith.constant 0 : index
    %c0_8 = arith.constant 0 : index
    %27 = vector.load %arg3[%c0_6, %c0_7, %c0_8] : memref<3x160x128xbf16, #tpu.memory_space<vmem>>, vector<1x160x128xbf16>
    %28 = vector.shape_cast %27 : vector<1x160x128xbf16> to vector<160x128xbf16>
    %cst_9 = arith.constant dense<0.000000e+00> : vector<8x128xf32>
    %29 = tpu.matmul %26, %28, %cst_9 {dimension_numbers = #tpu.dot_dimension_numbers<[1], [0], [0], [1], [0, 0, 1, 1], [], []>} : vector<8x160xbf16>, vector<160x128xbf16>, vector<8x128xf32> -> vector<8x128xf32>
    %c1 = arith.constant 1 : index
    %c0_10 = arith.constant 0 : index
    %c0_11 = arith.constant 0 : index
    %30 = vector.load %arg3[%c1, %c0_10, %c0_11] : memref<3x160x128xbf16, #tpu.memory_space<vmem>>, vector<1x160x128xbf16>
    %31 = vector.shape_cast %30 : vector<1x160x128xbf16> to vector<160x128xbf16>
    %cst_12 = arith.constant dense<0.000000e+00> : vector<8x128xf32>
    %32 = tpu.matmul %26, %31, %cst_12 {dimension_numbers = #tpu.dot_dimension_numbers<[1], [0], [0], [1], [0, 0, 1, 1], [], []>} : vector<8x160xbf16>, vector<160x128xbf16>, vector<8x128xf32> -> vector<8x128xf32>
    %33 = arith.addf %29, %32 : vector<8x128xf32>
    %c2 = arith.constant 2 : index
    %c0_13 = arith.constant 0 : index
    %c0_14 = arith.constant 0 : index
    %34 = vector.load %arg3[%c2, %c0_13, %c0_14] : memref<3x160x128xbf16, #tpu.memory_space<vmem>>, vector<1x160x128xbf16>
    %35 = vector.shape_cast %34 : vector<1x160x128xbf16> to vector<160x128xbf16>
    %cst_15 = arith.constant dense<0.000000e+00> : vector<8x128xf32>
    %36 = tpu.matmul %26, %35, %cst_15 {dimension_numbers = #tpu.dot_dimension_numbers<[1], [0], [0], [1], [0, 0, 1, 1], [], []>} : vector<8x160xbf16>, vector<160x128xbf16>, vector<8x128xf32> -> vector<8x128xf32>
    %37 = arith.addf %33, %36 : vector<8x128xf32>
    %c0_16 = arith.constant 0 : index
    %c0_17 = arith.constant 0 : index
    %38 = vector.load %arg4[%c0_16, %c0_17] : memref<8x128xf32, #tpu.memory_space<vmem>>, vector<8x128xf32>
    tpu.vector_store %arg4[%c0_16, %c0_17], %37 {strides = array<i32>} : memref<8x128xf32, #tpu.memory_space<vmem>>, vector<8x128xf32>,
    return
  }
  func.func @transform_0(%arg0: i32) -> (i32, i32) {
    %c0_i32 = arith.constant 0 : i32
    %c0_i32_0 = arith.constant 0 : i32
    return %arg0, %c0_i32 : i32, i32
  }
  func.func @transform_1(%arg0: i32) -> (i32, i32) {
    %c0_i32 = arith.constant 0 : i32
    %c0_i32_0 = arith.constant 0 : i32
    %c0_i32_1 = arith.constant 0 : i32
    return %c0_i32, %c0_i32_0 : i32, i32
  }
  func.func @transform_2(%arg0: i32) -> (i32, i32, i32) {
    %c0_i32 = arith.constant 0 : i32
    %c0_i32_0 = arith.constant 0 : i32
    %c0_i32_1 = arith.constant 0 : i32
    %c0_i32_2 = arith.constant 0 : i32
    return %c0_i32, %c0_i32_0, %c0_i32_1 : i32, i32, i32
  }
  func.func @transform_3(%arg0: i32) -> (i32, i32) {
    %c0_i32 = arith.constant 0 : i32
    %c0_i32_0 = arith.constant 0 : i32
    return %arg0, %c0_i32 : i32, i32
  }
}

</mosaic_0001>

<llo_original>
// kernel: tpu_custom_call.1
$region0: #{tpu_custom_call.1}
  #allocation0 [shape = 'u32[]', space=smem, size = 0x4, offset = 0x4, fixed_abs, tag = 'smem constant byte address 0x4 - core index']
  #allocation1 [shape = 'u32[144,128]{1,0:T(1,128)}', space=vmem, size = 0x12000, scoped, tag = 'internal scratch']
  %s0 = inlined_call_operand.hbm [shape: s32[8,16], index: 0, kind: input, shape index: {}]
  %s1 = inlined_call_operand.hbm [shape: f32[16,160], index: 1, kind: input, shape index: {}]
  %s2 = inlined_call_operand.hbm [shape: bf16[3,160,128], index: 2, kind: input, shape index: {}]
  %s3 = inlined_call_operand.hbm [shape: f32[8,128], index: 3, kind: output, shape index: {}]
  %s4 = sld [smem:[#allocation0]]
  $region34: #{tpu_custom_call.1} parent=0
    _
  %s6 = ssub.s32 1, %s4
  %s7 = scalar_select 0, %s6, %s4
  $region1: #{tpu_custom_call.1} parent=0
    #allocation2 [shape = 'u8[4096]{0}', space=vmem, size = 0x1000, scoped, tag = 'input window, operand 0, single buffered']
    #allocation3 [shape = 's32[1]{0}', space=sflag, size = 0x4, scoped, tag = 'scoped memory for tpu_custom_call.1']
    #allocation4 [shape = 's32[1]{0}', space=sflag, size = 0x4, scoped, tag = 'scoped memory for tpu_custom_call.1']
    #allocation5 [shape = 'u8[16384]{0}', space=vmem, size = 0x4000, scoped, tag = 'input window, operand 1, single buffered']
    #allocation6 [shape = 's32[1]{0}', space=sflag, size = 0x4, scoped, tag = 'scoped memory for tpu_custom_call.1']
    #allocation7 [shape = 'u8[122880]{0}', space=vmem, size = 0x1e000, scoped, tag = 'input window, operand 2, single buffered']
    #allocation8 [shape = 'u8[4096]{0}', space=vmem, size = 0x1000, scoped, tag = 'output window, operand 0, single buffered']
    %8 = vsyncpa [#allocation3], 0
    %9 = vsyncpa [#allocation6], 0
    %10 = vsyncpa [#allocation4], 0
    // Predicated region
    $region2: #{tpu_custom_call.1} parent=1 // pred_check
      _
    $region3: #{tpu_custom_call.1} parent=1 // pred_check_branch
      %12 = sbr.rel (0) target = $region5
    $region4: #{tpu_custom_call.1} parent=1 // pred_region
      %s14 = ssub.s32 128, 128
      %15 = vsyncadd [#allocation3], %s14
      %s17 = sshll.u32 [#allocation2], 4
      %s18 = int_to_ptr.vmem [resolvable:$true] %s17
      %20 = dma.hbm_to_vmem [thread:$0]  %s0, 128, %s18, [#allocation3]
    $region5: #{tpu_custom_call.1} parent=1 // pred_fallthru
      _
    // Predicated region
    $region6: #{tpu_custom_call.1} parent=1 // pred_check
      _
    $region7: #{tpu_custom_call.1} parent=1 // pred_check_branch
      %22 = sbr.rel (0) target = $region9
    $region8: #{tpu_custom_call.1} parent=1 // pred_region
      %s24 = ssub.s32 512, 512
      %25 = vsyncadd [#allocation6], %s24
      %s26 = sshll.u32 [#allocation5], 4
      %s27 = int_to_ptr.vmem [resolvable:$true] %s26
      %32 = dma.hbm_to_vmem [thread:$0]  %s1, 512, %s27, [#allocation6], 256, 256, 16
    $region9: #{tpu_custom_call.1} parent=1 // pred_fallthru
      _
    // Predicated region
    $region10: #{tpu_custom_call.1} parent=1 // pred_check
      _
    $region11: #{tpu_custom_call.1} parent=1 // pred_check_branch
      %34 = sbr.rel (0) target = $region13
    $region12: #{tpu_custom_call.1} parent=1 // pred_region
      %s36 = ssub.s32 3840, 3840
      %37 = vsyncadd [#allocation6], %s36
      %s38 = sshll.u32 [#allocation7], 4
      %s39 = int_to_ptr.vmem [resolvable:$true] %s38
      %44 = dma.hbm_to_vmem [thread:$0]  %s2, 3840, %s39, [#allocation6], 64, 64, 4
    $region13: #{tpu_custom_call.1} parent=1 // pred_fallthru
      _
    // Predicated region
    $region14: #{tpu_custom_call.1} parent=1 // pred_check
      _
    $region15: #{tpu_custom_call.1} parent=1 // pred_check_branch
      %46 = sbr.rel (0) target = $region17
    $region16: #{tpu_custom_call.1} parent=1 // pred_region
      %47 = dma.done [#allocation3], 128
    $region17: #{tpu_custom_call.1} parent=1 // pred_fallthru
      _
    // Predicated region
    $region18: #{tpu_custom_call.1} parent=1 // pred_check
      _
    $region19: #{tpu_custom_call.1} parent=1 // pred_check_branch
      %49 = sbr.rel (0) target = $region21
    $region20: #{tpu_custom_call.1} parent=1 // pred_region
      %50 = dma.done [#allocation6], 512
    $region21: #{tpu_custom_call.1} parent=1 // pred_fallthru
      _
    // Predicated region
    $region22: #{tpu_custom_call.1} parent=1 // pred_check
      _
    $region23: #{tpu_custom_call.1} parent=1 // pred_check_branch
      %52 = sbr.rel (0) target = $region25
    $region24: #{tpu_custom_call.1} parent=1 // pred_region
      %53 = dma.done [#allocation6], 3840
    $region25: #{tpu_custom_call.1} parent=1 // pred_fallthru
      _
    %v55 = vld [vmem:[#allocation2] sm:$0xff]
    %v56 = vcvt.s32.f32 %v55
    %v57 = vld [vmem:[#allocation5] sm:$0xff]
    %v58 = vld [vmem:[#allocation5 + $0x8] sm:$0xff]
    %v59 = vld [vmem:[#allocation5 + $0x10] sm:$0xff]
    %v60 = vld [vmem:[#allocation5 + $0x18] sm:$0xff]
    %vm61 = vcmask 130048
    %v63 = vsel %vm61, %v56, 0
    %65 = vmatprep.subr.mxu0 %v58
    %66 = vmatpush1.msra.mxu0 %v57
    %67 = vmatprep.subr.mxu0 %v60
    %68 = vmatpush1.msra.mxu0 %v59
    %69 = vmatprep.subr.mxu0 0.0
    %70 = vmatpush1.msra.mxu0 0.0
    %71 = vmatprep.subr.mxu0 0.0
    %72 = vmatpush1.msra.mxu0 0.0
    %73 = vmatprep.subr.mxu0 0.0
    %74 = vmatpush1.msra.mxu0 0.0
    %75 = vmatprep.subr.mxu0 0.0
    %76 = vmatpush1.msra.mxu0 0.0
    %77 = vmatprep.subr.mxu0 0.0
    %78 = vmatpush1.msra.mxu0 0.0
    %79 = vmatprep.subr.mxu0 0.0
    %80 = vmatpush1.msra.mxu0 0.0
    %81 = vmatprep.subr.mxu0 0.0
    %82 = vmatpush1.msra.mxu0 0.0
    %83 = vmatprep.subr.mxu0 0.0
    %84 = vmatpush1.msra.mxu0 0.0
    %85 = vmatprep.subr.mxu0 0.0
    %86 = vmatpush1.msra.mxu0 0.0
    %87 = vmatprep.subr.mxu0 0.0
    %88 = vmatpush1.msra.mxu0 0.0
    %89 = vmatprep.subr.mxu0 0.0
    %90 = vmatpush1.msra.mxu0 0.0
    %91 = vmatprep.subr.mxu0 0.0
    %92 = vmatpush1.msra.mxu0 0.0
    %93 = vmatprep.subr.mxu0 0.0
    %94 = vmatpush1.msra.mxu0 0.0
    %95 = vmatprep.subr.mxu0 0.0
    %96 = vmatpush1.msra.mxu0 0.0
    %97 = vmatprep.subr.mxu0 0.0
    %98 = vmatpush1.msra.mxu0 0.0
    %99 = vmatprep.subr.mxu0 0.0
    %100 = vmatpush1.msra.mxu0 0.0
    %101 = vmatprep.subr.mxu0 0.0
    %102 = vmatpush1.msra.mxu0 0.0
    %103 = vmatprep.subr.mxu0 0.0
    %104 = vmatpush1.msra.mxu0 0.0
    %105 = vmatprep.subr.mxu0 0.0
    %106 = vmatpush1.msra.mxu0 0.0
    %107 = vmatprep.subr.mxu0 0.0
    %108 = vmatpush1.msra.mxu0 0.0
    %109 = vmatprep.subr.mxu0 0.0
    %110 = vmatpush1.msra.mxu0 0.0
    %111 = vmatprep.subr.mxu0 0.0
    %112 = vmatpush1.msra.mxu0 0.0
    %113 = vmatprep.subr.mxu0 0.0
    %114 = vmatpush1.msra.mxu0 0.0
    %115 = vmatprep.subr.mxu0 0.0
    %116 = vmatpush1.msra.mxu0 0.0
    %117 = vmatprep.subr.mxu0 0.0
    %118 = vmatpush1.msra.mxu0 0.0
    %119 = vmatprep.subr.mxu0 0.0
    %120 = vmatpush1.msra.mxu0 0.0
    %121 = vmatprep.subr.mxu0 0.0
    %122 = vmatpush1.msra.mxu0 0.0
    %123 = vmatprep.subr.mxu0 0.0
    %124 = vmatpush1.msra.mxu0 0.0
    %125 = vmatprep.subr.mxu0 0.0
    %126 = vmatpush1.msra.mxu0 0.0
    %127 = vmatprep.subr.mxu0 0.0
    %128 = vmatpush1.msra.mxu0 0.0
    %129 = vmatprep.mubr.f32.mxu0 0.0
    %130 = vmatmul.mubr.f32.gmra.mrb[0].mxu0 %v63
    %v131 = vpop.f32.mrb[0].mxu0
    %v132 = vadd.f32 0.0, %v131
    %v133 = vpop.f32.mrb[0].mxu0
    %v134 = vadd.f32 0.0, %v133
    %135 = vdwg.mxu0
    %v136 = vlaneseq
    %v137 = vand.u32 %v136, 127
    %v138 = vadd.s32 %v137, 128
    %vm139 = vcmp.lt.s32.totalorder %v137, 0
    %v140 = vsub.s32 0, %v137
    %v141 = vsel %vm139, %v140, %v137
    %v142 = vmul.u32.u64.compose %v141, 3435973837
    %v143 = vextract.low.u32 %v142
    %v144 = vextract.high.u32 %v142
    %v145 = vshrl.u32 %v144, 3
    %v146 = vmul.u32 %v145, 10
    %v147 = vsub.s32 %v141, %v146
    %v148 = vsub.s32 0, %v147
    %v149 = vsel %vm139, %v148, %v147
    %vm150 = vcmp.lt.s32.totalorder %v138, 0
    %v151 = vsub.s32 0, %v138
    %v152 = vsel %vm150, %v151, %v138
    %v153 = vmul.u32.u64.compose %v152, 3435973837
    %v154 = vextract.low.u32 %v153
    %v155 = vextract.high.u32 %v153
    %v156 = vshrl.u32 %v155, 3
    %v157 = vmul.u32 %v156, 10
    %v158 = vsub.s32 %v152, %v157
    %v159 = vsub.s32 0, %v158
    %v160 = vsel %vm150, %v159, %v158
    %vm161 = vcmp.ne.s32.totalorder %v149, 0
    %vm162 = vcmp.ne.s32.totalorder %v160, 0
    %vm163 = vcmp.lt.s32.totalorder %v149, 0
    %vm164 = vcmp.lt.s32.totalorder %v160, 0
    %vm165 = vmand %vm163, %vm161
    %vm166 = vmand %vm164, %vm162
    %v167 = vadd.s32 %v149, 10
    %v168 = vadd.s32 %v160, 10
    %v169 = vsel %vm165, %v167, %v149
    %v170 = vsel %vm166, %v168, %v160
    %v171 = vcvt.s32.f32 %v169
    %v172 = vcvt.s32.f32 %v170
    %vm173 = vcmp.eq.f32.partialorder %v132, %v171
    %vm174 = vcmp.eq.f32.partialorder %v134, %v172
    %v175 = vsel %vm173, 1, 0
    %v176 = vsel %vm174, 1, 0
    %v177 = vcvt.s32.f32 %v175
    %v178 = vcvt.s32.f32 %v176
    %v179 = vpack.c.bf16 %v177, %v177
    %v180 = vpack.c.bf16 %v178, %v178
    %v181 = vld [vmem:[#allocation7] sm:$0xf]
    %v182 = vld [vmem:[#allocation7 + $0x4] sm:$0xf]
    %v183 = vld [vmem:[#allocation7 + $0x8] sm:$0xf]
    %v184 = vld [vmem:[#allocation7 + $0xc] sm:$0xf]
    %v185 = vld [vmem:[#allocation7 + $0x10] sm:$0xf]
    %v186 = vld [vmem:[#allocation7 + $0x14] sm:$0xf]
    %v187 = vld [vmem:[#allocation7 + $0x18] sm:$0xf]
    %v188 = vld [vmem:[#allocation7 + $0x1c] sm:$0xf]
    %v189 = vld [vmem:[#allocation7 + $0x20] sm:$0xf]
    %v190 = vld [vmem:[#allocation7 + $0x24] sm:$0xf]
    %v191 = vld [vmem:[#allocation7 + $0x28] sm:$0xf]
    %v192 = vld [vmem:[#allocation7 + $0x2c] sm:$0xf]
    %v193 = vld [vmem:[#allocation7 + $0x30] sm:$0xf]
    %v194 = vld [vmem:[#allocation7 + $0x34] sm:$0xf]
    %v195 = vld [vmem:[#allocation7 + $0x38] sm:$0xf]
    %v196 = vld [vmem:[#allocation7 + $0x3c] sm:$0xf]
    %v197 = vld [vmem:[#allocation7 + $0x40] sm:$0xf]
    %v198 = vld [vmem:[#allocation7 + $0x44] sm:$0xf]
    %v199 = vld [vmem:[#allocation7 + $0x48] sm:$0xf]
    %v200 = vld [vmem:[#allocation7 + $0x4c] sm:$0xf]
    %s201 = scalar_lea.vmem [#allocation7], 80
    %v202 = vld [vmem:[%s201] sm:$0xf]
    %v203 = vld [vmem:[%s201 + $0x4] sm:$0xf]
    %v204 = vld [vmem:[%s201 + $0x8] sm:$0xf]
    %v205 = vld [vmem:[%s201 + $0xc] sm:$0xf]
    %v206 = vld [vmem:[%s201 + $0x10] sm:$0xf]
    %v207 = vld [vmem:[%s201 + $0x14] sm:$0xf]
    %v208 = vld [vmem:[%s201 + $0x18] sm:$0xf]
    %v209 = vld [vmem:[%s201 + $0x1c] sm:$0xf]
    %v210 = vld [vmem:[%s201 + $0x20] sm:$0xf]
    %v211 = vld [vmem:[%s201 + $0x24] sm:$0xf]
    %v212 = vld [vmem:[%s201 + $0x28] sm:$0xf]
    %v213 = vld [vmem:[%s201 + $0x2c] sm:$0xf]
    %v214 = vld [vmem:[%s201 + $0x30] sm:$0xf]
    %v215 = vld [vmem:[%s201 + $0x34] sm:$0xf]
    %v216 = vld [vmem:[%s201 + $0x38] sm:$0xf]
    %v217 = vld [vmem:[%s201 + $0x3c] sm:$0xf]
    %v218 = vld [vmem:[%s201 + $0x40] sm:$0xf]
    %v219 = vld [vmem:[%s201 + $0x44] sm:$0xf]
    %v220 = vld [vmem:[%s201 + $0x48] sm:$0xf]
    %v221 = vld [vmem:[%s201 + $0x4c] sm:$0xf]
    %v242 = vunpack.c.l.b16 %v202
    %v243 = vunpack.c.l.b16 %v203
    %v244 = vunpack.c.l.b16 %v204
    %v245 = vunpack.c.l.b16 %v205
    %v246 = vunpack.c.l.b16 %v206
    %v247 = vunpack.c.l.b16 %v207
    %v248 = vunpack.c.l.b16 %v208
    %v249 = vunpack.c.l.b16 %v209
    %v250 = vunpack.c.l.b16 %v210
    %v251 = vunpack.c.l.b16 %v211
    %v252 = vunpack.c.l.b16 %v212
    %v253 = vunpack.c.l.b16 %v213
    %v254 = vunpack.c.l.b16 %v214
    %v255 = vunpack.c.l.b16 %v215
    %v256 = vunpack.c.l.b16 %v216
    %v257 = vunpack.c.l.b16 %v217
    %v258 = vunpack.c.l.b16 %v218
    %v259 = vunpack.c.l.b16 %v219
    %v260 = vunpack.c.l.b16 %v220
    %v261 = vunpack.c.l.b16 %v221
    %v262 = vpack.c.b16 %v243, %v242
    %v263 = vpack.c.b16 %v245, %v244
    %v264 = vpack.c.b16 %v247, %v246
    %v265 = vpack.c.b16 %v249, %v248
    %v266 = vpack.c.b16 %v251, %v250
    %v267 = vpack.c.b16 %v253, %v252
    %v268 = vpack.c.b16 %v255, %v254
    %v269 = vpack.c.b16 %v257, %v256
    %v270 = vpack.c.b16 %v259, %v258
    %v271 = vpack.c.b16 %v261, %v260
    %vm282 = vcmask 261120
    %v284 = vsel %vm282, %v180, 0
    %286 = vmatprep.subr.bf16.mxu0 0
    %287 = vmatpush1.bf16.msra.mxu0 %v262
    %288 = vmatprep.subr.bf16.mxu0 0
    %289 = vmatpush1.bf16.msra.mxu0 %v263
    %290 = vmatprep.subr.bf16.mxu0 0
    %291 = vmatpush1.bf16.msra.mxu0 %v264
    %292 = vmatprep.subr.bf16.mxu0 0
    %293 = vmatpush1.bf16.msra.mxu0 %v265
    %294 = vmatprep.subr.bf16.mxu0 0
    %295 = vmatpush1.bf16.msra.mxu0 %v266
    %296 = vmatprep.subr.bf16.mxu0 0
    %297 = vmatpush1.bf16.msra.mxu0 %v267
    %298 = vmatprep.subr.bf16.mxu0 0
    %299 = vmatpush1.bf16.msra.mxu0 %v268
    %300 = vmatprep.subr.bf16.mxu0 0
    %301 = vmatpush1.bf16.msra.mxu0 %v269
    %302 = vmatprep.subr.bf16.mxu0 0
    %303 = vmatpush1.bf16.msra.mxu0 %v270
    %304 = vmatprep.subr.bf16.mxu0 0
    %305 = vmatpush1.bf16.msra.mxu0 %v271
    %306 = vmatprep.subr.bf16.mxu0 0
    %307 = vmatpush1.bf16.msra.mxu0 0
    %308 = vmatprep.subr.bf16.mxu0 0
    %309 = vmatpush1.bf16.msra.mxu0 0
    %310 = vmatprep.subr.bf16.mxu0 0
    %311 = vmatpush1.bf16.msra.mxu0 0
    %312 = vmatprep.subr.bf16.mxu0 0
    %313 = vmatpush1.bf16.msra.mxu0 0
    %314 = vmatprep.subr.bf16.mxu0 0
    %315 = vmatpush1.bf16.msra.mxu0 0
    %316 = vmatprep.subr.bf16.mxu0 0
    %317 = vmatpush1.bf16.msra.mxu0 0
    %318 = vmatprep.mubr.bf16.mxu0 %v284
    %319 = vmatmul.mubr.bf16.gmra.mrb[0].mxu0 %v179
    %v320 = vpop.f32.mrb[0].mxu0
    %v321 = vadd.f32 0.0, %v320
    %v322 = vpop.f32.mrb[0].mxu0
    %v323 = vpop.f32.mrb[0].mxu0
    %v324 = vpop.f32.mrb[0].mxu0
    %325 = vdwg.mxu0
    %v346 = vunpack.c.l.b16 %v181
    %v347 = vunpack.c.l.b16 %v182
    %v348 = vunpack.c.l.b16 %v183
    %v349 = vunpack.c.l.b16 %v184
    %v350 = vunpack.c.l.b16 %v185
    %v351 = vunpack.c.l.b16 %v186
    %v352 = vunpack.c.l.b16 %v187
    %v353 = vunpack.c.l.b16 %v188
    %v354 = vunpack.c.l.b16 %v189
    %v355 = vunpack.c.l.b16 %v190
    %v356 = vunpack.c.l.b16 %v191
    %v357 = vunpack.c.l.b16 %v192
    %v358 = vunpack.c.l.b16 %v193
    %v359 = vunpack.c.l.b16 %v194
    %v360 = vunpack.c.l.b16 %v195
    %v361 = vunpack.c.l.b16 %v196
    %v362 = vunpack.c.l.b16 %v197
    %v363 = vunpack.c.l.b16 %v198
    %v364 = vunpack.c.l.b16 %v199
    %v365 = vunpack.c.l.b16 %v200
    %v366 = vpack.c.b16 %v347, %v346
    %v367 = vpack.c.b16 %v349, %v348
    %v368 = vpack.c.b16 %v351, %v350
    %v369 = vpack.c.b16 %v353, %v352
    %v370 = vpack.c.b16 %v355, %v354
    %v371 = vpack.c.b16 %v357, %v356
    %v372 = vpack.c.b16 %v359, %v358
    %v373 = vpack.c.b16 %v361, %v360
    %v374 = vpack.c.b16 %v363, %v362
    %v375 = vpack.c.b16 %v365, %v364
    %386 = vmatprep.subr.bf16.mxu0 0
    %387 = vmatpush1.bf16.msra.mxu0 %v366
    %388 = vmatprep.subr.bf16.mxu0 0
    %389 = vmatpush1.bf16.msra.mxu0 %v367
    %390 = vmatprep.subr.bf16.mxu0 0
    %391 = vmatpush1.bf16.msra.mxu0 %v368
    %392 = vmatprep.subr.bf16.mxu0 0
    %393 = vmatpush1.bf16.msra.mxu0 %v369
    %394 = vmatprep.subr.bf16.mxu0 0
    %395 = vmatpush1.bf16.msra.mxu0 %v370
    %396 = vmatprep.subr.bf16.mxu0 0
    %397 = vmatpush1.bf16.msra.mxu0 %v371
    %398 = vmatprep.subr.bf16.mxu0 0
    %399 = vmatpush1.bf16.msra.mxu0 %v372
    %400 = vmatprep.subr.bf16.mxu0 0
    %401 = vmatpush1.bf16.msra.mxu0 %v373
    %402 = vmatprep.subr.bf16.mxu0 0
    %403 = vmatpush1.bf16.msra.mxu0 %v374
    %404 = vmatprep.subr.bf16.mxu0 0
    %405 = vmatpush1.bf16.msra.mxu0 %v375
    %406 = vmatprep.subr.bf16.mxu0 0
    %407 = vmatpush1.bf16.msra.mxu0 0
    %408 = vmatprep.subr.bf16.mxu0 0
    %409 = vmatpush1.bf16.msra.mxu0 0
    %410 = vmatprep.subr.bf16.mxu0 0
    %411 = vmatpush1.bf16.msra.mxu0 0
    %412 = vmatprep.subr.bf16.mxu0 0
    %413 = vmatpush1.bf16.msra.mxu0 0
    %414 = vmatprep.subr.bf16.mxu0 0
    %415 = vmatpush1.bf16.msra.mxu0 0
    %416 = vmatprep.subr.bf16.mxu0 0
    %417 = vmatpush1.bf16.msra.mxu0 0
    %418 = vmatprep.mubr.bf16.mxu0 %v284
    %419 = vmatmul.mubr.bf16.gmra.mrb[0].mxu0 %v179
    %v420 = vpop.f32.mrb[0].mxu0
    %v421 = vadd.f32 %v321, %v420
    %v422 = vpop.f32.mrb[0].mxu0
    %v423 = vpop.f32.mrb[0].mxu0
    %v424 = vpop.f32.mrb[0].mxu0
    %425 = vdwg.mxu0
    %s426 = scalar_lea.vmem [#allocation7], 160
    %v427 = vld [vmem:[%s426] sm:$0xf]
    %v428 = vld [vmem:[%s426 + $0x4] sm:$0xf]
    %v429 = vld [vmem:[%s426 + $0x8] sm:$0xf]
    %v430 = vld [vmem:[%s426 + $0xc] sm:$0xf]
    %v431 = vld [vmem:[%s426 + $0x10] sm:$0xf]
    %v432 = vld [vmem:[%s426 + $0x14] sm:$0xf]
    %v433 = vld [vmem:[%s426 + $0x18] sm:$0xf]
    %v434 = vld [vmem:[%s426 + $0x1c] sm:$0xf]
    %v435 = vld [vmem:[%s426 + $0x20] sm:$0xf]
    %v436 = vld [vmem:[%s426 + $0x24] sm:$0xf]
    %v437 = vld [vmem:[%s426 + $0x28] sm:$0xf]
    %v438 = vld [vmem:[%s426 + $0x2c] sm:$0xf]
    %v439 = vld [vmem:[%s426 + $0x30] sm:$0xf]
    %v440 = vld [vmem:[%s426 + $0x34] sm:$0xf]
    %v441 = vld [vmem:[%s426 + $0x38] sm:$0xf]
    %v442 = vld [vmem:[%s426 + $0x3c] sm:$0xf]
    %v443 = vld [vmem:[%s426 + $0x40] sm:$0xf]
    %v444 = vld [vmem:[%s426 + $0x44] sm:$0xf]
    %v445 = vld [vmem:[%s426 + $0x48] sm:$0xf]
    %v446 = vld [vmem:[%s426 + $0x4c] sm:$0xf]
    %v467 = vunpack.c.l.b16 %v427
    %v468 = vunpack.c.l.b16 %v428
    %v469 = vunpack.c.l.b16 %v429
    %v470 = vunpack.c.l.b16 %v430
    %v471 = vunpack.c.l.b16 %v431
    %v472 = vunpack.c.l.b16 %v432
    %v473 = vunpack.c.l.b16 %v433
    %v474 = vunpack.c.l.b16 %v434
    %v475 = vunpack.c.l.b16 %v435
    %v476 = vunpack.c.l.b16 %v436
    %v477 = vunpack.c.l.b16 %v437
    %v478 = vunpack.c.l.b16 %v438
    %v479 = vunpack.c.l.b16 %v439
    %v480 = vunpack.c.l.b16 %v440
    %v481 = vunpack.c.l.b16 %v441
    %v482 = vunpack.c.l.b16 %v442
    %v483 = vunpack.c.l.b16 %v443
    %v484 = vunpack.c.l.b16 %v444
    %v485 = vunpack.c.l.b16 %v445
    %v486 = vunpack.c.l.b16 %v446
    %v487 = vpack.c.b16 %v468, %v467
    %v488 = vpack.c.b16 %v470, %v469
    %v489 = vpack.c.b16 %v472, %v471
    %v490 = vpack.c.b16 %v474, %v473
    %v491 = vpack.c.b16 %v476, %v475
    %v492 = vpack.c.b16 %v478, %v477
    %v493 = vpack.c.b16 %v480, %v479
    %v494 = vpack.c.b16 %v482, %v481
    %v495 = vpack.c.b16 %v484, %v483
    %v496 = vpack.c.b16 %v486, %v485
    %507 = vmatprep.subr.bf16.mxu0 0
    %508 = vmatpush1.bf16.msra.mxu0 %v487
    %509 = vmatprep.subr.bf16.mxu0 0
    %510 = vmatpush1.bf16.msra.mxu0 %v488
    %511 = vmatprep.subr.bf16.mxu0 0
    %512 = vmatpush1.bf16.msra.mxu0 %v489
    %513 = vmatprep.subr.bf16.mxu0 0
    %514 = vmatpush1.bf16.msra.mxu0 %v490
    %515 = vmatprep.subr.bf16.mxu0 0
    %516 = vmatpush1.bf16.msra.mxu0 %v491
    %517 = vmatprep.subr.bf16.mxu0 0
    %518 = vmatpush1.bf16.msra.mxu0 %v492
    %519 = vmatprep.subr.bf16.mxu0 0
    %520 = vmatpush1.bf16.msra.mxu0 %v493
    %521 = vmatprep.subr.bf16.mxu0 0
    %522 = vmatpush1.bf16.msra.mxu0 %v494
    %523 = vmatprep.subr.bf16.mxu0 0
    %524 = vmatpush1.bf16.msra.mxu0 %v495
    %525 = vmatprep.subr.bf16.mxu0 0
    %526 = vmatpush1.bf16.msra.mxu0 %v496
    %527 = vmatprep.subr.bf16.mxu0 0
    %528 = vmatpush1.bf16.msra.mxu0 0
    %529 = vmatprep.subr.bf16.mxu0 0
    %530 = vmatpush1.bf16.msra.mxu0 0
    %531 = vmatprep.subr.bf16.mxu0 0
    %532 = vmatpush1.bf16.msra.mxu0 0
    %533 = vmatprep.subr.bf16.mxu0 0
    %534 = vmatpush1.bf16.msra.mxu0 0
    %535 = vmatprep.subr.bf16.mxu0 0
    %536 = vmatpush1.bf16.msra.mxu0 0
    %537 = vmatprep.subr.bf16.mxu0 0
    %538 = vmatpush1.bf16.msra.mxu0 0
    %539 = vmatprep.mubr.bf16.mxu0 %v284
    %540 = vmatmul.mubr.bf16.gmra.mrb[0].mxu0 %v179
    %v541 = vpop.f32.mrb[0].mxu0
    %v542 = vadd.f32 0.0, %v541
    %v543 = vpop.f32.mrb[0].mxu0
    %v544 = vpop.f32.mrb[0].mxu0
    %v545 = vpop.f32.mrb[0].mxu0
    %546 = vdwg.mxu0
    %v547 = vadd.f32 %v421, %v542
    %548 = vst [vmem:[#allocation8] sm:$0xff] %v547
    // Predicated region
    $region26: #{tpu_custom_call.1} parent=1 // pred_check
      _
    $region27: #{tpu_custom_call.1} parent=1 // pred_check_branch
      %550 = sbr.rel (0) target = $region29
    $region28: #{tpu_custom_call.1} parent=1 // pred_region
      %s552 = ssub.s32 128, 128
      %553 = vsyncadd [#allocation4], %s552
      %s555 = sshll.u32 [#allocation8], 4
      %s556 = int_to_ptr.vmem [resolvable:$true] %s555
      %558 = dma.vmem_to_hbm [thread:$0]  %s556, 128, %s3, [#allocation4]
    $region29: #{tpu_custom_call.1} parent=1 // pred_fallthru
      _
    // Predicated region
    $region30: #{tpu_custom_call.1} parent=1 // pred_check
      _
    $region31: #{tpu_custom_call.1} parent=1 // pred_check_branch
      %560 = sbr.rel (0) target = $region33
    $region32: #{tpu_custom_call.1} parent=1 // pred_region
      %561 = dma.done [#allocation4], 128
    $region33: #{tpu_custom_call.1} parent=1 // pred_fallthru
      _
    %562 = vsyncpa [#allocation3], 1
    %563 = vsyncpa [#allocation6], 1
    %564 = vsyncpa [#allocation4], 1

</llo_original>
